<compile_context>
chip_gen: v5e
topology: v5e:2x2
jax: 0.10.0
libtpu: 0.0.40
codegen_flags: <defaults>
</compile_context>

<pallas_src>
import numpy as np
import jax
import jax.numpy as jnp
from jax.experimental import pallas as pl
from jax.experimental.pallas import tpu as pltpu


def _round_up(v, m):
    return ((v + m - 1) // m) * m


def decoder_kernel(x_ref, w1_ref, b1_ref, w2_ref, b2_ref, w3_ref, b3_ref, o_ref):
    # In-kernel cast of the activation tile to bf16 (MXU operand); f32 accumulation.
    x = x_ref[...].astype(jnp.bfloat16)

    # Layer 1: Linear(z_dim, N) -> Dropout(eval: identity) -> ReLU (bias/ReLU in f32).
    h = jnp.dot(x, w1_ref[...], preferred_element_type=jnp.float32)
    h = jnp.maximum(h + b1_ref[...], 0.0)

    # Layer 2: Linear(N, N) -> Dropout(eval: identity) -> ReLU.
    h = jnp.dot(h.astype(jnp.bfloat16), w2_ref[...], preferred_element_type=jnp.float32)
    h = jnp.maximum(h + b2_ref[...], 0.0)

    # Layer 3: Linear(N, x_dim_padded) -> Sigmoid; store in the (possibly bf16) output dtype.
    h = jnp.dot(h.astype(jnp.bfloat16), w3_ref[...], preferred_element_type=jnp.float32)
    o_ref[...] = jax.nn.sigmoid(h + b3_ref[...]).astype(o_ref.dtype)


def init_params(key, z_dim, N, x_dim):
    """Deterministic synthetic init (PyTorch-like uniform fan-in scaling), f32, (in,out) layout."""
    ks = jax.random.split(key, 6)

    def lin(kw, kb, fan_in, fan_out):
        bound = 1.0 / np.sqrt(fan_in)
        w = jax.random.uniform(kw, (fan_in, fan_out), jnp.float32, -bound, bound)
        b = jax.random.uniform(kb, (1, fan_out), jnp.float32, -bound, bound)
        return w, b

    w1, b1 = lin(ks[0], ks[1], z_dim, N)
    w2, b2 = lin(ks[2], ks[3], N, N)
    w3, b3 = lin(ks[4], ks[5], N, x_dim)
    return {"w1": w1, "b1": b1, "w2": w2, "b2": b2, "w3": w3, "b3": b3}


def prepare_params(params):
    """One-time kernel-side preparation: pad N / x_dim to multiples of 128 (lane-dense MXU
    tiles, unmasked stores) and cast weights to bf16.  Zero padding is exact: padded hidden
    units stay 0 through ReLU and contribute nothing downstream; padded output columns are
    sliced off.  Called once; the per-forward wrapper does no weight casting/padding."""
    w1, b1, w2, b2, w3, b3 = (params[k] for k in ("w1", "b1", "w2", "b2", "w3", "b3"))
    Z, N = w1.shape
    X = w3.shape[1]
    N_pad = _round_up(N, 128)
    X_pad = _round_up(X, 128)

    def pad2(a, rows, cols):
        return jnp.pad(a, ((0, rows - a.shape[0]), (0, cols - a.shape[1])))

    return {
        "w1": pad2(w1, Z, N_pad).astype(jnp.bfloat16),
        "b1": pad2(b1, 1, N_pad),                      # biases stay f32
        "w2": pad2(w2, N_pad, N_pad).astype(jnp.bfloat16),
        "b2": pad2(b2, 1, N_pad),
        "w3": pad2(w3, N_pad, X_pad).astype(jnp.bfloat16),
        "b3": pad2(b3, 1, X_pad),
        "z_dim": Z, "n_dim": N, "x_dim": X,
    }


def _invariant_spec_kwargs():
    """BlockSpec kwargs for grid-invariant operands: single-buffer them when supported."""
    if hasattr(pl, "Buffered"):
        try:
            pl.BlockSpec((8, 128), lambda i: (0, 0), pipeline_mode=pl.Buffered(1))
            return {"pipeline_mode": pl.Buffered(1)}
        except TypeError:
            pass
    return {}


def decoder_forward(x, prepared, *, bm=None, out_dtype=jnp.bfloat16):
    """x: (B, z_dim) float32.  prepared: output of prepare_params.  Returns (B, x_dim) out_dtype."""
    w1, b1, w2, b2, w3, b3 = (prepared[k] for k in ("w1", "b1", "w2", "b2", "w3", "b3"))
    B, Z = x.shape
    assert Z == w1.shape[0], "x feature dim must match w1 fan-in"
    N_pad = w1.shape[1]
    X_pad = w3.shape[1]
    X = prepared["x_dim"]

    # Batch tile: 256-tall fills the MXU; cap by the (8-rounded) batch.  On 128-MiB-VMEM
    # parts (v5e/v6e) a larger bm (512/1024) can be passed explicitly for big batches.
    if bm is None:
        bm = min(256, _round_up(B, 8))
        # v7x megacore: keep >= 2 grid steps when the batch allows it so the "parallel"
        # batch axis can shard across both TensorCores (no cost on single-TC v5e/v6e).
        if _round_up(B, 8) >= 16 and _round_up(B, bm) // bm < 2:
            bm = _round_up(pl.cdiv(_round_up(B, 8), 2), 8)
    bm = max(8, _round_up(bm, 8))

    # Pad batch so the grid evenly covers it; extra rows are computed and sliced off.
    B_pad = _round_up(B, bm)
    if B_pad != B:
        x = jnp.pad(x, ((0, B_pad - B), (0, 0)))
    grid = (B_pad // bm,)

    out_itemsize = jnp.dtype(out_dtype).itemsize
    weight_bytes = sum(int(a.size) * a.dtype.itemsize for a in (w1, w2, w3))
    bias_bytes = sum(int(a.size) * a.dtype.itemsize for a in (b1, b2, b3))

    cost = pl.CostEstimate(
        flops=int(2 * B_pad * (Z * N_pad + N_pad * N_pad + N_pad * X_pad)),
        transcendentals=int(B_pad * X_pad),  # sigmoid
        bytes_accessed=int(B_pad * Z * x.dtype.itemsize + weight_bytes + bias_bytes
                           + B_pad * X_pad * out_itemsize),
    )

    def run(inv):
        nbuf = 1 if inv else 2
        # Explicit VMEM budget: resident weights/biases (x nbuf) + double-buffered x/out
        # tiles + headroom; floored at the default scoped limit, capped under v7x's 64 MiB.
        vmem_est = (nbuf * (weight_bytes + bias_bytes)
                    + 2 * bm * Z * x.dtype.itemsize
                    + 2 * bm * X_pad * out_itemsize
                    + (4 << 20))
        vmem_limit = int(min(max(vmem_est, 32 << 20), 60 << 20))
        # TODO(synk): for very large N (weights alone near the VMEM budget, esp. on v7x) add a
        # second grid axis tiling the out-feature dim of w2/w3 instead of keeping all weights
        # resident.
        return pl.pallas_call(
            decoder_kernel,
            out_shape=jax.ShapeDtypeStruct((B_pad, X_pad), out_dtype),
            grid=grid,
            in_specs=[
                pl.BlockSpec((bm, Z), lambda i: (i, 0)),                 # x tile (f32, cast in-kernel)
                pl.BlockSpec((Z, N_pad), lambda i: (0, 0), **inv),       # w1 bf16 (grid-invariant)
                pl.BlockSpec((1, N_pad), lambda i: (0, 0), **inv),       # b1 f32
                pl.BlockSpec((N_pad, N_pad), lambda i: (0, 0), **inv),   # w2 bf16
                pl.BlockSpec((1, N_pad), lambda i: (0, 0), **inv),       # b2 f32
                pl.BlockSpec((N_pad, X_pad), lambda i: (0, 0), **inv),   # w3 bf16 (lane-padded)
                pl.BlockSpec((1, X_pad), lambda i: (0, 0), **inv),       # b3 f32 (lane-padded)
            ],
            out_specs=pl.BlockSpec((bm, X_pad), lambda i: (i, 0)),
            compiler_params=pltpu.CompilerParams(
                dimension_semantics=("parallel",),
                vmem_limit_bytes=vmem_limit,
            ),
            cost_estimate=cost,
        )(x, w1, b1, w2, b2, w3, b3)

    inv = _invariant_spec_kwargs()
    try:
        out = run(inv)
    except (TypeError, ValueError, NotImplementedError, pltpu.LoweringException):
        if not inv:
            raise  # genuine lowering/shape error: do not mask it
        # Only the single-buffering request was rejected: fall back to default double
        # buffering of the invariant blocks (correctness identical, 2x weight VMEM).
        out = run({})

    return out[:B, :X]


def decoder_reference(x, p):
    h = jnp.maximum(x @ p["w1"] + p["b1"], 0.0)
    h = jnp.maximum(h @ p["w2"] + p["b2"], 0.0)
    return jax.nn.sigmoid(h @ p["w3"] + p["b3"])


if __name__ == "__main__":
    # Small shapes consistent with Decoder(x_dim, N, z_dim).
    # B=44 (not a multiple of 8) exercises batch padding; x_dim=64 exercises lane padding
    # (64 -> 128); default bm keeps a >=2-step grid (megacore path).
    B, z_dim, N, x_dim = 44, 32, 128, 64

    key = jax.random.PRNGKey(0)
    k_x, k_p = jax.random.split(key)
    x = jax.random.normal(k_x, (B, z_dim), dtype=jnp.float32)
    params = init_params(k_p, z_dim, N, x_dim)
    prepared = prepare_params(params)

    ref = jax.block_until_ready(decoder_reference(x, params))

    # Default tiling, bf16 output (bf16 MXU operands -> relaxed tolerance).
    out = jax.block_until_ready(decoder_forward(x, prepared))
    assert out.shape == (B, x_dim) and out.dtype == jnp.bfloat16
    np.testing.assert_allclose(np.asarray(out, dtype=np.float32), np.asarray(ref),
                               rtol=2e-2, atol=2e-2)

    # Multi-step grid + f32 output path (bm=16 -> 3 grid steps over the padded batch).
    out32 = jax.block_until_ready(decoder_forward(x, prepared, bm=16, out_dtype=jnp.float32))
    assert out32.shape == (B, x_dim) and out32.dtype == jnp.float32
    np.testing.assert_allclose(np.asarray(out32), np.asarray(ref), rtol=2e-2, atol=2e-2)

    print("KERNEL_OK")
</pallas_src>

<mosaic_0001>
module attributes {stable_mosaic.version = 11 : i64} {
  func.func @decoder_kernel(%arg0: i32, %arg1: memref<24x32xf32, #tpu.memory_space<vmem>>, %arg2: memref<32x128xbf16, #tpu.memory_space<vmem>>, %arg3: memref<1x128xf32, #tpu.memory_space<vmem>>, %arg4: memref<128x128xbf16, #tpu.memory_space<vmem>>, %arg5: memref<1x128xf32, #tpu.memory_space<vmem>>, %arg6: memref<128x128xbf16, #tpu.memory_space<vmem>>, %arg7: memref<1x128xf32, #tpu.memory_space<vmem>>, %arg8: memref<24x128xbf16, #tpu.memory_space<vmem>>) attributes {dimension_semantics = [#tpu.dimension_semantics<parallel>], iteration_bounds = array<i64: 2>, scalar_prefetch = 0 : i64, scratch_operands = 0 : i64, tpu.core_type = #tpu.core_type<tc>, window_params = [{transform_indices = @transform_0, window_bounds = array<i64: 24, 32>}, {pipeline_mode = #tpu.pipeline_mode<synchronous>, transform_indices = @transform_1, window_bounds = array<i64: 32, 128>}, {pipeline_mode = #tpu.pipeline_mode<synchronous>, transform_indices = @transform_2, window_bounds = array<i64: 1, 128>}, {pipeline_mode = #tpu.pipeline_mode<synchronous>, transform_indices = @transform_3, window_bounds = array<i64: 128, 128>}, {pipeline_mode = #tpu.pipeline_mode<synchronous>, transform_indices = @transform_4, window_bounds = array<i64: 1, 128>}, {pipeline_mode = #tpu.pipeline_mode<synchronous>, transform_indices = @transform_5, window_bounds = array<i64: 128, 128>}, {pipeline_mode = #tpu.pipeline_mode<synchronous>, transform_indices = @transform_6, window_bounds = array<i64: 1, 128>}, {transform_indices = @transform_7, window_bounds = array<i64: 24, 128>}]} {
    %c0 = arith.constant 0 : index
    %c0_0 = arith.constant 0 : index
    %0 = vector.load %arg1[%c0, %c0_0] : memref<24x32xf32, #tpu.memory_space<vmem>>, vector<24x32xf32>
    %1 = arith.truncf %0 : vector<24x32xf32> to vector<24x32xbf16>
    %c0_1 = arith.constant 0 : index
    %c0_2 = arith.constant 0 : index
    %2 = vector.load %arg2[%c0_1, %c0_2] : memref<32x128xbf16, #tpu.memory_space<vmem>>, vector<32x128xbf16>
    %cst = arith.constant dense<0.000000e+00> : vector<24x128xf32>
    %3 = tpu.matmul %1, %2, %cst {dimension_numbers = #tpu.dot_dimension_numbers<[1], [0], [0], [1], [0, 0, 1, 1], [], []>} : vector<24x32xbf16>, vector<32x128xbf16>, vector<24x128xf32> -> vector<24x128xf32>
    %c0_3 = arith.constant 0 : index
    %c0_4 = arith.constant 0 : index
    %4 = vector.load %arg3[%c0_3, %c0_4] : memref<1x128xf32, #tpu.memory_space<vmem>>, vector<1x128xf32>
    %5 = vector.broadcast %4 : vector<1x128xf32> to vector<24x128xf32>
    %6 = arith.addf %3, %5 : vector<24x128xf32>
    %cst_5 = arith.constant 0.000000e+00 : f32
    %7 = vector.broadcast %cst_5 : f32 to vector<24x128xf32>
    %8 = arith.maximumf %6, %7 : vector<24x128xf32>
    %9 = arith.truncf %8 : vector<24x128xf32> to vector<24x128xbf16>
    %c0_6 = arith.constant 0 : index
    %c0_7 = arith.constant 0 : index
    %10 = vector.load %arg4[%c0_6, %c0_7] : memref<128x128xbf16, #tpu.memory_space<vmem>>, vector<128x128xbf16>
    %cst_8 = arith.constant dense<0.000000e+00> : vector<24x128xf32>
    %11 = tpu.matmul %9, %10, %cst_8 {dimension_numbers = #tpu.dot_dimension_numbers<[1], [0], [0], [1], [0, 0, 1, 1], [], []>} : vector<24x128xbf16>, vector<128x128xbf16>, vector<24x128xf32> -> vector<24x128xf32>
    %c0_9 = arith.constant 0 : index
    %c0_10 = arith.constant 0 : index
    %12 = vector.load %arg5[%c0_9, %c0_10] : memref<1x128xf32, #tpu.memory_space<vmem>>, vector<1x128xf32>
    %13 = vector.broadcast %12 : vector<1x128xf32> to vector<24x128xf32>
    %14 = arith.addf %11, %13 : vector<24x128xf32>
    %cst_11 = arith.constant 0.000000e+00 : f32
    %15 = vector.broadcast %cst_11 : f32 to vector<24x128xf32>
    %16 = arith.maximumf %14, %15 : vector<24x128xf32>
    %17 = arith.truncf %16 : vector<24x128xf32> to vector<24x128xbf16>
    %c0_12 = arith.constant 0 : index
    %c0_13 = arith.constant 0 : index
    %18 = vector.load %arg6[%c0_12, %c0_13] : memref<128x128xbf16, #tpu.memory_space<vmem>>, vector<128x128xbf16>
    %cst_14 = arith.constant dense<0.000000e+00> : vector<24x128xf32>
    %19 = tpu.matmul %17, %18, %cst_14 {dimension_numbers = #tpu.dot_dimension_numbers<[1], [0], [0], [1], [0, 0, 1, 1], [], []>} : vector<24x128xbf16>, vector<128x128xbf16>, vector<24x128xf32> -> vector<24x128xf32>
    %c0_15 = arith.constant 0 : index
    %c0_16 = arith.constant 0 : index
    %20 = vector.load %arg7[%c0_15, %c0_16] : memref<1x128xf32, #tpu.memory_space<vmem>>, vector<1x128xf32>
    %21 = vector.broadcast %20 : vector<1x128xf32> to vector<24x128xf32>
    %22 = arith.addf %19, %21 : vector<24x128xf32>
    %23 = arith.negf %22 : vector<24x128xf32>
    %24 = math.exp %23 : vector<24x128xf32>
    %cst_17 = arith.constant 1.000000e+00 : f32
    %25 = vector.broadcast %cst_17 : f32 to vector<24x128xf32>
    %26 = arith.addf %25, %24 : vector<24x128xf32>
    %27 = arith.divf %25, %26 : vector<24x128xf32>
    %28 = arith.truncf %27 : vector<24x128xf32> to vector<24x128xbf16>
    %c0_18 = arith.constant 0 : index
    %c0_19 = arith.constant 0 : index
    %29 = vector.load %arg8[%c0_18, %c0_19] : memref<24x128xbf16, #tpu.memory_space<vmem>>, vector<24x128xbf16>
    tpu.vector_store %arg8[%c0_18, %c0_19], %28 {strides = array<i32>} : memref<24x128xbf16, #tpu.memory_space<vmem>>, vector<24x128xbf16>,
    return
  }
  func.func @transform_0(%arg0: i32) -> (i32, i32) {
    %c0_i32 = arith.constant 0 : i32
    %c0_i32_0 = arith.constant 0 : i32
    return %arg0, %c0_i32 : i32, i32
  }
  func.func @transform_1(%arg0: i32) -> (i32, i32) {
    %c0_i32 = arith.constant 0 : i32
    %c0_i32_0 = arith.constant 0 : i32
    %c0_i32_1 = arith.constant 0 : i32
    return %c0_i32, %c0_i32_0 : i32, i32
  }
  func.func @transform_2(%arg0: i32) -> (i32, i32) {
    %c0_i32 = arith.constant 0 : i32
    %c0_i32_0 = arith.constant 0 : i32
    %c0_i32_1 = arith.constant 0 : i32
    return %c0_i32, %c0_i32_0 : i32, i32
  }
  func.func @transform_3(%arg0: i32) -> (i32, i32) {
    %c0_i32 = arith.constant 0 : i32
    %c0_i32_0 = arith.constant 0 : i32
    %c0_i32_1 = arith.constant 0 : i32
    return %c0_i32, %c0_i32_0 : i32, i32
  }
  func.func @transform_4(%arg0: i32) -> (i32, i32) {
    %c0_i32 = arith.constant 0 : i32
    %c0_i32_0 = arith.constant 0 : i32
    %c0_i32_1 = arith.constant 0 : i32
    return %c0_i32, %c0_i32_0 : i32, i32
  }
  func.func @transform_5(%arg0: i32) -> (i32, i32) {
    %c0_i32 = arith.constant 0 : i32
    %c0_i32_0 = arith.constant 0 : i32
    %c0_i32_1 = arith.constant 0 : i32
    return %c0_i32, %c0_i32_0 : i32, i32
  }
  func.func @transform_6(%arg0: i32) -> (i32, i32) {
    %c0_i32 = arith.constant 0 : i32
    %c0_i32_0 = arith.constant 0 : i32
    %c0_i32_1 = arith.constant 0 : i32
    return %c0_i32, %c0_i32_0 : i32, i32
  }
  func.func @transform_7(%arg0: i32) -> (i32, i32) {
    %c0_i32 = arith.constant 0 : i32
    %c0_i32_0 = arith.constant 0 : i32
    return %arg0, %c0_i32 : i32, i32
  }
}

</mosaic_0001>

<llo_original>
// kernel: tpu_custom_call.1
$region0: #{tpu_custom_call.1}
  #allocation0 [shape = 'u32[]', space=smem, size = 0x4, offset = 0x4, fixed_abs, tag = 'smem constant byte address 0x4 - core index']
  #allocation1 [shape = 'u32[72,128]{1,0:T(1,128)}', space=vmem, size = 0x9000, scoped, tag = 'internal scratch']
  %s0 = inlined_call_operand.vmem [shape: f32[48,32], index: 0, kind: input, shape index: {}]
  %s1 = inlined_call_operand.vmem [shape: bf16[32,128], index: 1, kind: input, shape index: {}]
  %s2 = inlined_call_operand.vmem [shape: f32[1,128], index: 2, kind: input, shape index: {}]
  %s3 = inlined_call_operand.vmem [shape: bf16[128,128], index: 3, kind: input, shape index: {}]
  %s4 = inlined_call_operand.vmem [shape: f32[1,128], index: 4, kind: input, shape index: {}]
  %s5 = inlined_call_operand.hbm [shape: bf16[128,128], index: 5, kind: input, shape index: {}]
  %s6 = inlined_call_operand.vmem [shape: f32[1,128], index: 6, kind: input, shape index: {}]
  %s7 = inlined_call_operand.hbm [shape: bf16[48,128], index: 7, kind: output, shape index: {}]
  %s8 = sld [smem:[#allocation0]]
  $region65: #{tpu_custom_call.1} parent=0
    _
  %s10 = ssub.s32 1, %s8
  %s11 = scalar_select 0, %s10, %s8
  $region1: #{tpu_custom_call.1} parent=0
    #allocation2 [shape = 'u8[32768]{0}', space=vmem, size = 0x8000, scoped, tag = 'input window, operand 5, single buffered']
    #allocation3 [shape = 's32[2]{0}', space=sflag, size = 0x8, scoped, tag = 'scoped memory for tpu_custom_call.1']
    #allocation4 [shape = 's32[2]{0}', space=sflag, size = 0x8, scoped, tag = 'scoped memory for tpu_custom_call.1']
    #allocation5 [shape = 'u8[12288]{0}', space=vmem, size = 0x3000, scoped, tag = 'output window, operand 0']
    %12 = vsyncpa [#allocation3], 0
    %13 = vsyncpa [#allocation4], 0
    %s14 = scalar_lea.sflag [#allocation4], 1
    %15 = vsyncpa %s14, 0
    loop: start=0, step=1, limit=4
    $region2: #{tpu_custom_call.1} parent=1 // loop_pre_header
      _
    $region3: #{tpu_custom_call.1} parent=1 // loop_header
      %s17 = sphi 0, %s21
      %p18 = scmp.ge.s32.totalorder %s17, 4
      %s27 = sphi 0, %s29
      %s30 = sphi 0, %s27
      %s31 = sphi 0, %s30
      %s47 = sphi 0, %s31
      %s51 = sphi 0, %s51
      %s53 = sphi 0, %s51
      %s54 = sphi 0, %s53
      %s68 = sphi 0, %s54
      %s72 = sphi 0, %s72
      %s74 = sphi 0, %s72
      %s75 = sphi 0, %s74
      %s89 = sphi 0, %s75
      %s93 = sphi 0, %s93
      %s95 = sphi 0, %s93
      %s96 = sphi 0, %s95
      %s110 = sphi 0, %s96
      %s114 = sphi 0, %s114
      %s116 = sphi 0, %s114
      %s117 = sphi 0, %s116
      %s131 = sphi 0, %s117
      %s135 = sphi 0, %s135
      %s137 = sphi 0, %s135
      %s138 = sphi 0, %s137
      %s152 = sphi 0, %s138
      %s156 = sphi 0, %s156
      %s158 = sphi 0, %s156
      %s159 = sphi 0, %s158
      %s173 = sphi 0, %s159
      %s179 = sphi 0, %s181
      %s182 = sphi 0, %s179
      %s183 = sphi 0, %s182
      %s199 = sphi 0, %s183
    $region4: #{tpu_custom_call.1} parent=1 // loop_header_branch
      %20 = sbr.rel (%p18) target = $region8
    $region5: #{tpu_custom_call.1} parent=1 // loop_body
      %s22 = ssub.s32 %s17, 1
      %s23 = ssub.s32 %s17, 2
      %s24 = sadd.s32 %s17, 1
      %s25 = ssub.s32 %s17, %s24
      %p26 = scmp.eq.s32.totalorder %s25, 0
      %s28 = sadd.s32 %s27, 1
      %s29 = scalar_select %p26, %s27, %s28
      %p32 = pneg %p26
      %p33 = scmp.eq.s32.totalorder %s17, 1
      %p34 = por %p32, %p33
      %p35 = scmp.ne.s32.totalorder %s27, %s30
      %p36 = scmp.eq.s32.totalorder %s17, 0
      %p37 = por %p35, %p36
      %p38 = scmp.ne.s32.totalorder %s27, %s30
      %p39 = scmp.eq.s32.totalorder %s22, 1
      %p40 = por %p38, %p39
      %p41 = scmp.ne.s32.totalorder %s30, %s31
      %p42 = scmp.eq.s32.totalorder %s22, 0
      %p43 = por %p41, %p42
      %p44 = scmp.ne.s32.totalorder %s30, %s31
      %p45 = scmp.eq.s32.totalorder %s23, 1
      %p46 = por %p44, %p45
      %p48 = scmp.ne.s32.totalorder %s31, %s47
      %p49 = scmp.eq.s32.totalorder %s23, 0
      %p50 = por %p48, %p49
      %s52 = sadd.s32 %s51, 1
      %p55 = scmp.eq.s32.totalorder %s17, 1
      %p56 = scmp.ne.s32.totalorder %s51, %s53
      %p57 = scmp.eq.s32.totalorder %s17, 0
      %p58 = por %p56, %p57
      %p59 = scmp.ne.s32.totalorder %s51, %s53
      %p60 = scmp.eq.s32.totalorder %s22, 1
      %p61 = por %p59, %p60
      %p62 = scmp.ne.s32.totalorder %s53, %s54
      %p63 = scmp.eq.s32.totalorder %s22, 0
      %p64 = por %p62, %p63
      %p65 = scmp.ne.s32.totalorder %s53, %s54
      %p66 = scmp.eq.s32.totalorder %s23, 1
      %p67 = por %p65, %p66
      %p69 = scmp.ne.s32.totalorder %s54, %s68
      %p70 = scmp.eq.s32.totalorder %s23, 0
      %p71 = por %p69, %p70
      %s73 = sadd.s32 %s72, 1
      %p76 = scmp.eq.s32.totalorder %s17, 1
      %p77 = scmp.ne.s32.totalorder %s72, %s74
      %p78 = scmp.eq.s32.totalorder %s17, 0
      %p79 = por %p77, %p78
      %p80 = scmp.ne.s32.totalorder %s72, %s74
      %p81 = scmp.eq.s32.totalorder %s22, 1
      %p82 = por %p80, %p81
      %p83 = scmp.ne.s32.totalorder %s74, %s75
      %p84 = scmp.eq.s32.totalorder %s22, 0
      %p85 = por %p83, %p84
      %p86 = scmp.ne.s32.totalorder %s74, %s75
      %p87 = scmp.eq.s32.totalorder %s23, 1
      %p88 = por %p86, %p87
      %p90 = scmp.ne.s32.totalorder %s75, %s89
      %p91 = scmp.eq.s32.totalorder %s23, 0
      %p92 = por %p90, %p91
      %s94 = sadd.s32 %s93, 1
      %p97 = scmp.eq.s32.totalorder %s17, 1
      %p98 = scmp.ne.s32.totalorder %s93, %s95
      %p99 = scmp.eq.s32.totalorder %s17, 0
      %p100 = por %p98, %p99
      %p101 = scmp.ne.s32.totalorder %s93, %s95
      %p102 = scmp.eq.s32.totalorder %s22, 1
      %p103 = por %p101, %p102
      %p104 = scmp.ne.s32.totalorder %s95, %s96
      %p105 = scmp.eq.s32.totalorder %s22, 0
      %p106 = por %p104, %p105
      %p107 = scmp.ne.s32.totalorder %s95, %s96
      %p108 = scmp.eq.s32.totalorder %s23, 1
      %p109 = por %p107, %p108
      %p111 = scmp.ne.s32.totalorder %s96, %s110
      %p112 = scmp.eq.s32.totalorder %s23, 0
      %p113 = por %p111, %p112
      %s115 = sadd.s32 %s114, 1
      %p118 = scmp.eq.s32.totalorder %s17, 1
      %p119 = scmp.ne.s32.totalorder %s114, %s116
      %p120 = scmp.eq.s32.totalorder %s17, 0
      %p121 = por %p119, %p120
      %p122 = scmp.ne.s32.totalorder %s114, %s116
      %p123 = scmp.eq.s32.totalorder %s22, 1
      %p124 = por %p122, %p123
      %p125 = scmp.ne.s32.totalorder %s116, %s117
      %p126 = scmp.eq.s32.totalorder %s22, 0
      %p127 = por %p125, %p126
      %p128 = scmp.ne.s32.totalorder %s116, %s117
      %p129 = scmp.eq.s32.totalorder %s23, 1
      %p130 = por %p128, %p129
      %p132 = scmp.ne.s32.totalorder %s117, %s131
      %p133 = scmp.eq.s32.totalorder %s23, 0
      %p134 = por %p132, %p133
      %s136 = sadd.s32 %s135, 1
      %p139 = scmp.eq.s32.totalorder %s17, 1
      %p140 = scmp.ne.s32.totalorder %s135, %s137
      %p141 = scmp.eq.s32.totalorder %s17, 0
      %p142 = por %p140, %p141
      %p143 = scmp.ne.s32.totalorder %s135, %s137
      %p144 = scmp.eq.s32.totalorder %s22, 1
      %p145 = por %p143, %p144
      %p146 = scmp.ne.s32.totalorder %s137, %s138
      %p147 = scmp.eq.s32.totalorder %s22, 0
      %p148 = por %p146, %p147
      %p149 = scmp.ne.s32.totalorder %s137, %s138
      %p150 = scmp.eq.s32.totalorder %s23, 1
      %p151 = por %p149, %p150
      %p153 = scmp.ne.s32.totalorder %s138, %s152
      %p154 = scmp.eq.s32.totalorder %s23, 0
      %p155 = por %p153, %p154
      %s157 = sadd.s32 %s156, 1
      %p160 = scmp.eq.s32.totalorder %s17, 1
      %p161 = scmp.ne.s32.totalorder %s156, %s158
      %p162 = scmp.eq.s32.totalorder %s17, 0
      %p163 = por %p161, %p162
      %p164 = scmp.ne.s32.totalorder %s156, %s158
      %p165 = scmp.eq.s32.totalorder %s22, 1
      %p166 = por %p164, %p165
      %p167 = scmp.ne.s32.totalorder %s158, %s159
      %p168 = scmp.eq.s32.totalorder %s22, 0
      %p169 = por %p167, %p168
      %p170 = scmp.ne.s32.totalorder %s158, %s159
      %p171 = scmp.eq.s32.totalorder %s23, 1
      %p172 = por %p170, %p171
      %p174 = scmp.ne.s32.totalorder %s159, %s173
      %p175 = scmp.eq.s32.totalorder %s23, 0
      %p176 = por %p174, %p175
      %s177 = ssub.s32 %s17, %s24
      %p178 = scmp.eq.s32.totalorder %s177, 0
      %s180 = sadd.s32 %s179, 1
      %s181 = scalar_select %p178, %s179, %s180
      %p184 = pneg %p178
      %p185 = scmp.eq.s32.totalorder %s17, 1
      %p186 = por %p184, %p185
      %p187 = scmp.ne.s32.totalorder %s179, %s182
      %p188 = scmp.eq.s32.totalorder %s17, 0
      %p189 = por %p187, %p188
      %p190 = scmp.ne.s32.totalorder %s179, %s182
      %p191 = scmp.eq.s32.totalorder %s22, 1
      %p192 = por %p190, %p191
      %p193 = scmp.ne.s32.totalorder %s182, %s183
      %p194 = scmp.eq.s32.totalorder %s22, 0
      %p195 = por %p193, %p194
      %p196 = scmp.ne.s32.totalorder %s182, %s183
      %p197 = scmp.eq.s32.totalorder %s23, 1
      %p198 = por %p196, %p197
      %p200 = scmp.ne.s32.totalorder %s183, %s199
      %p201 = scmp.eq.s32.totalorder %s23, 0
      %p202 = por %p200, %p201
      %p203 = scmp.le.s32.totalorder 1, %s17
      %p204 = scmp.lt.s32.totalorder %s17, 3
      %p205 = pnand %p203, %p204
      %p206 = pneg %p205
      // Predicated region
      $region9: #{tpu_custom_call.1} parent=5 // pred_check
        _
      $region10: #{tpu_custom_call.1} parent=5 // pred_check_branch
        %208 = sbr.rel (%p205) target = $region12
      $region11: #{tpu_custom_call.1} parent=5 // pred_region
        %s209 = ssub.s32 %s17, 1
        // Predicated region
        $region13: #{tpu_custom_call.1} parent=11 // pred_check
          %p210 = pneg %p64
        $region14: #{tpu_custom_call.1} parent=11 // pred_check_branch
          %212 = sbr.rel (%p210) target = $region16
        $region15: #{tpu_custom_call.1} parent=11 // pred_region
          _
        $region16: #{tpu_custom_call.1} parent=11 // pred_fallthru
          _
        // Predicated region
        $region17: #{tpu_custom_call.1} parent=11 // pred_check
          %p213 = pneg %p85
        $region18: #{tpu_custom_call.1} parent=11 // pred_check_branch
          %215 = sbr.rel (%p213) target = $region20
        $region19: #{tpu_custom_call.1} parent=11 // pred_region
          _
        $region20: #{tpu_custom_call.1} parent=11 // pred_fallthru
          _
        // Predicated region
        $region21: #{tpu_custom_call.1} parent=11 // pred_check
          %p216 = pneg %p106
        $region22: #{tpu_custom_call.1} parent=11 // pred_check_branch
          %218 = sbr.rel (%p216) target = $region24
        $region23: #{tpu_custom_call.1} parent=11 // pred_region
          _
        $region24: #{tpu_custom_call.1} parent=11 // pred_fallthru
          _
        // Predicated region
        $region25: #{tpu_custom_call.1} parent=11 // pred_check
          %p219 = pneg %p127
        $region26: #{tpu_custom_call.1} parent=11 // pred_check_branch
          %221 = sbr.rel (%p219) target = $region28
        $region27: #{tpu_custom_call.1} parent=11 // pred_region
          _
        $region28: #{tpu_custom_call.1} parent=11 // pred_fallthru
          _
        // Predicated region
        $region29: #{tpu_custom_call.1} parent=11 // pred_check
          %p222 = pneg %p148
        $region30: #{tpu_custom_call.1} parent=11 // pred_check_branch
          %224 = sbr.rel (%p222) target = $region32
        $region31: #{tpu_custom_call.1} parent=11 // pred_region
          %226 = vsyncadd [#allocation3], 0
          %s227 = sshll.u32 %s5, 4
          %s228 = int_to_ptr.hbm [resolvable:$true] %s227
          %s229 = sshll.u32 [#allocation2], 4
          %s230 = int_to_ptr.vmem [resolvable:$true] %s229
          %235 = dma.hbm_to_vmem [thread:$0]  %s228, 1024, %s230, [#allocation3], 64, 64, 4
        $region32: #{tpu_custom_call.1} parent=11 // pred_fallthru
          _
        // Predicated region
        $region33: #{tpu_custom_call.1} parent=11 // pred_check
          %p236 = pneg %p169
        $region34: #{tpu_custom_call.1} parent=11 // pred_check_branch
          %238 = sbr.rel (%p236) target = $region36
        $region35: #{tpu_custom_call.1} parent=11 // pred_region
          _
        $region36: #{tpu_custom_call.1} parent=11 // pred_fallthru
          _
      $region12: #{tpu_custom_call.1} parent=5 // pred_fallthru
        _
      %p239 = scmp.lt.s32.totalorder %s17, 2
      // Predicated region
      $region37: #{tpu_custom_call.1} parent=5 // pred_check
        %p240 = pneg %p239
      $region38: #{tpu_custom_call.1} parent=5 // pred_check_branch
        %242 = sbr.rel (%p240) target = $region40
      $region39: #{tpu_custom_call.1} parent=5 // pred_region
        // Predicated region
        $region41: #{tpu_custom_call.1} parent=39 // pred_check
          %p243 = pneg %p37
        $region42: #{tpu_custom_call.1} parent=39 // pred_check_branch
          %245 = sbr.rel (%p243) target = $region44
        $region43: #{tpu_custom_call.1} parent=39 // pred_region
          %s246 = smul.u32 3, %s17
          %p247 = scmp.lt.s32.totalorder %s246, 5
          %s248 = scalar_select %p247, %s246, 5
          %s249 = smul.addr %s248, 8
          %s250 = scalar_lea.vmem %s0, %s249
          %s251 = smul.u32 3, %s17
        $region44: #{tpu_custom_call.1} parent=39 // pred_fallthru
          _
      $region40: #{tpu_custom_call.1} parent=5 // pred_fallthru
        _
      %p252 = scmp.le.s32.totalorder 1, %s17
      %p253 = scmp.lt.s32.totalorder %s17, 3
      %p254 = pnand %p252, %p253
      %p255 = pneg %p254
      // Predicated region
      $region45: #{tpu_custom_call.1} parent=5 // pred_check
        _
      $region46: #{tpu_custom_call.1} parent=5 // pred_check_branch
        %257 = sbr.rel (%p254) target = $region48
      $region47: #{tpu_custom_call.1} parent=5 // pred_region
        %s258 = ssub.s32 %s17, 1
        // Predicated region
        $region49: #{tpu_custom_call.1} parent=47 // pred_check
          %p259 = pneg %p148
        $region50: #{tpu_custom_call.1} parent=47 // pred_check_branch
          %261 = sbr.rel (%p259) target = $region52
        $region51: #{tpu_custom_call.1} parent=47 // pred_region
          %263 = dma.done [#allocation3], 1024
        $region52: #{tpu_custom_call.1} parent=47 // pred_fallthru
          _
        %s264 = smul.u32 3, %s22
        %p265 = scmp.lt.s32.totalorder %s264, 5
        %s266 = scalar_select %p265, %s264, 5
        %s267 = smul.addr %s266, 8
        %s268 = scalar_lea.vmem %s0, %s267
        %p269 = pneg %p43
        %p270 = pneg %p40
        %p271 = pneg %p64
        %p272 = pneg %p61
        %p273 = pneg %p85
        %p274 = pneg %p82
        %p275 = pneg %p106
        %p276 = pneg %p103
        %p277 = pneg %p127
        %p278 = pneg %p124
        %p279 = pneg %p148
        %p280 = pneg %p145
        %p281 = pneg %p169
        %p282 = pneg %p166
        %p283 = pneg %p195
        %p284 = pneg %p192
        %s285 = sand.u32 %s182, 1
        %s286 = scalar_lea.sflag [#allocation4], %s285
        %s287 = sand.u32 %s182, 1
        %s288 = smul.addr %s287, 12
        %s289 = scalar_lea.vmem [#allocation5], %s288
        %s290 = smul.u32 3, %s22
        %p291 = scmp.lt.s32.totalorder %s290, 5
        %s292 = scalar_select %p291, %s290, 5
        %s293 = smul.addr %s292, 8
        %s294 = scalar_lea.vmem %s0, %s293
        %s295 = smul.u32 3, %s22
        %s296 = smul.u32 3, %s22
        %v298 = vld [vmem:[%s294] sm:$0xff]
        %v299 = vld [vmem:[%s294 + $0x8] sm:$0xff]
        %v300 = vld [vmem:[%s294 + $0x10] sm:$0xff]
        %v301 = vpack.c.bf16 %v299, %v298
        %v302 = vpack.c.bf16 %v300, %v300
        %v303 = vld [vmem:[%s1] sm:$0xf]
        %v304 = vld [vmem:[%s1 + $0x4] sm:$0xf]
        %v305 = vld [vmem:[%s1 + $0x8] sm:$0xf]
        %v306 = vld [vmem:[%s1 + $0xc] sm:$0xf]
        %v307 = vld [vmem:[%s2] sm:$0x1]
        %v309 = vperm.slane %v307, 0
        %v315 = vunpack.c.l.b16 %v303
        %v316 = vunpack.c.l.b16 %v304
        %v317 = vunpack.c.l.b16 %v305
        %v318 = vunpack.c.l.b16 %v306
        %v319 = vpack.c.b16 %v316, %v315
        %v320 = vpack.c.b16 %v318, %v317
        %vm323 = vcmask 261120
        %v325 = vsel %vm323, %v301, 0
        %v328 = vsel %vm323, %v302, 0
        %330 = vmatpush.bf16.msra.mxu0 0
        %331 = vmatpush.bf16.msra.mxu0 0
        %332 = vmatpush.bf16.msra.mxu0 0
        %333 = vmatpush.bf16.msra.mxu0 0
        %334 = vmatpush.bf16.msra.mxu0 0
        %335 = vmatpush.bf16.msra.mxu0 0
        %336 = vmatpush.bf16.msra.mxu0 %v320
        %337 = vmatpush.bf16.msra.mxu0 %v319
        %338 = vmatmul.bf16.gmra.mxu0 %v325
        %v339 = vpop.f32.mrf.mxu0
        %v340 = vadd.f32 %v309, %v339
        %v341 = vpop.f32.mrf.mxu0
        %v342 = vadd.f32 %v309, %v341
        %343 = vmatmul.bf16.gmra.mxu0 %v328
        %v344 = vpop.f32.mrf.mxu0
        %v345 = vadd.f32 %v309, %v344
        %v346 = vpop.f32.mrf.mxu0
        %347 = vdwg.mxu0
        %v348 = vmax.f32 %v340, 0.0
        %v349 = vmax.f32 %v342, 0.0
        %v350 = vmax.f32 %v345, 0.0
        %v351 = vpack.c.bf16 %v349, %v348
        %v352 = vpack.c.bf16 %v350, %v350
        %v353 = vld [vmem:[%s3] sm:$0xf]
        %v354 = vld [vmem:[%s3 + $0x4] sm:$0xf]
        %v355 = vld [vmem:[%s3 + $0x8] sm:$0xf]
        %v356 = vld [vmem:[%s3 + $0xc] sm:$0xf]
        %v357 = vld [vmem:[%s3 + $0x10] sm:$0xf]
        %v358 = vld [vmem:[%s3 + $0x14] sm:$0xf]
        %v359 = vld [vmem:[%s3 + $0x18] sm:$0xf]
        %v360 = vld [vmem:[%s3 + $0x1c] sm:$0xf]
        %v361 = vld [vmem:[%s3 + $0x20] sm:$0xf]
        %v362 = vld [vmem:[%s3 + $0x24] sm:$0xf]
        %v363 = vld [vmem:[%s3 + $0x28] sm:$0xf]
        %v364 = vld [vmem:[%s3 + $0x2c] sm:$0xf]
        %v365 = vld [vmem:[%s3 + $0x30] sm:$0xf]
        %v366 = vld [vmem:[%s3 + $0x34] sm:$0xf]
        %v367 = vld [vmem:[%s3 + $0x38] sm:$0xf]
        %v368 = vld [vmem:[%s3 + $0x3c] sm:$0xf]
        %v369 = vld [vmem:[%s4] sm:$0x1]
        %v371 = vperm.slane %v369, 0
        %v389 = vunpack.c.l.b16 %v353
        %v390 = vunpack.c.l.b16 %v354
        %v391 = vunpack.c.l.b16 %v355
        %v392 = vunpack.c.l.b16 %v356
        %v393 = vunpack.c.l.b16 %v357
        %v394 = vunpack.c.l.b16 %v358
        %v395 = vunpack.c.l.b16 %v359
        %v396 = vunpack.c.l.b16 %v360
        %v397 = vunpack.c.l.b16 %v361
        %v398 = vunpack.c.l.b16 %v362
        %v399 = vunpack.c.l.b16 %v363
        %v400 = vunpack.c.l.b16 %v364
        %v401 = vunpack.c.l.b16 %v365
        %v402 = vunpack.c.l.b16 %v366
        %v403 = vunpack.c.l.b16 %v367
        %v404 = vunpack.c.l.b16 %v368
        %v405 = vpack.c.b16 %v390, %v389
        %v406 = vpack.c.b16 %v392, %v391
        %v407 = vpack.c.b16 %v394, %v393
        %v408 = vpack.c.b16 %v396, %v395
        %v409 = vpack.c.b16 %v398, %v397
        %v410 = vpack.c.b16 %v400, %v399
        %v411 = vpack.c.b16 %v402, %v401
        %v412 = vpack.c.b16 %v404, %v403
        %421 = vmatpush.bf16.msra.mxu0 %v412
        %422 = vmatpush.bf16.msra.mxu0 %v411
        %423 = vmatpush.bf16.msra.mxu0 %v410
        %424 = vmatpush.bf16.msra.mxu0 %v409
        %425 = vmatpush.bf16.msra.mxu0 %v408
        %426 = vmatpush.bf16.msra.mxu0 %v407
        %427 = vmatpush.bf16.msra.mxu0 %v406
        %428 = vmatpush.bf16.msra.mxu0 %v405
        %429 = vmatmul.bf16.gmra.mxu0 %v351
        %v430 = vpop.f32.mrf.mxu0
        %v431 = vadd.f32 %v371, %v430
        %v432 = vpop.f32.mrf.mxu0
        %v433 = vadd.f32 %v371, %v432
        %434 = vmatmul.bf16.gmra.mxu0 %v352
        %v435 = vpop.f32.mrf.mxu0
        %v436 = vadd.f32 %v371, %v435
        %v437 = vpop.f32.mrf.mxu0
        %438 = vdwg.mxu0
        %v439 = vmax.f32 %v431, 0.0
        %v440 = vmax.f32 %v433, 0.0
        %v441 = vmax.f32 %v436, 0.0
        %v442 = vpack.c.bf16 %v440, %v439
        %v443 = vpack.c.bf16 %v441, %v441
        %v444 = vld [vmem:[#allocation2] sm:$0xf]
        %v445 = vld [vmem:[#allocation2 + $0x4] sm:$0xf]
        %v446 = vld [vmem:[#allocation2 + $0x8] sm:$0xf]
        %v447 = vld [vmem:[#allocation2 + $0xc] sm:$0xf]
        %v448 = vld [vmem:[#allocation2 + $0x10] sm:$0xf]
        %v449 = vld [vmem:[#allocation2 + $0x14] sm:$0xf]
        %v450 = vld [vmem:[#allocation2 + $0x18] sm:$0xf]
        %v451 = vld [vmem:[#allocation2 + $0x1c] sm:$0xf]
        %v452 = vld [vmem:[#allocation2 + $0x20] sm:$0xf]
        %v453 = vld [vmem:[#allocation2 + $0x24] sm:$0xf]
        %v454 = vld [vmem:[#allocation2 + $0x28] sm:$0xf]
        %v455 = vld [vmem:[#allocation2 + $0x2c] sm:$0xf]
        %v456 = vld [vmem:[#allocation2 + $0x30] sm:$0xf]
        %v457 = vld [vmem:[#allocation2 + $0x34] sm:$0xf]
        %v458 = vld [vmem:[#allocation2 + $0x38] sm:$0xf]
        %v459 = vld [vmem:[#allocation2 + $0x3c] sm:$0xf]
        %v460 = vld [vmem:[%s6] sm:$0x1]
        %v462 = vperm.slane %v460, 0
        %v480 = vunpack.c.l.b16 %v444
        %v481 = vunpack.c.l.b16 %v445
        %v482 = vunpack.c.l.b16 %v446
        %v483 = vunpack.c.l.b16 %v447
        %v484 = vunpack.c.l.b16 %v448
        %v485 = vunpack.c.l.b16 %v449
        %v486 = vunpack.c.l.b16 %v450
        %v487 = vunpack.c.l.b16 %v451
        %v488 = vunpack.c.l.b16 %v452
        %v489 = vunpack.c.l.b16 %v453
        %v490 = vunpack.c.l.b16 %v454
        %v491 = vunpack.c.l.b16 %v455
        %v492 = vunpack.c.l.b16 %v456
        %v493 = vunpack.c.l.b16 %v457
        %v494 = vunpack.c.l.b16 %v458
        %v495 = vunpack.c.l.b16 %v459
        %v496 = vpack.c.b16 %v481, %v480
        %v497 = vpack.c.b16 %v483, %v482
        %v498 = vpack.c.b16 %v485, %v484
        %v499 = vpack.c.b16 %v487, %v486
        %v500 = vpack.c.b16 %v489, %v488
        %v501 = vpack.c.b16 %v491, %v490
        %v502 = vpack.c.b16 %v493, %v492
        %v503 = vpack.c.b16 %v495, %v494
        %512 = vmatpush.bf16.msra.mxu0 %v503
        %513 = vmatpush.bf16.msra.mxu0 %v502
        %514 = vmatpush.bf16.msra.mxu0 %v501
        %515 = vmatpush.bf16.msra.mxu0 %v500
        %516 = vmatpush.bf16.msra.mxu0 %v499
        %517 = vmatpush.bf16.msra.mxu0 %v498
        %518 = vmatpush.bf16.msra.mxu0 %v497
        %519 = vmatpush.bf16.msra.mxu0 %v496
        %520 = vmatmul.bf16.gmra.mxu0 %v442
        %v521 = vpop.f32.mrf.mxu0
        %v522 = vadd.f32 %v462, %v521
        %v523 = vpop.f32.mrf.mxu0
        %v524 = vadd.f32 %v462, %v523
        %525 = vmatmul.bf16.gmra.mxu0 %v443
        %v526 = vpop.f32.mrf.mxu0
        %v527 = vadd.f32 %v462, %v526
        %v528 = vpop.f32.mrf.mxu0
        %529 = vdwg.mxu0
        %v530 = vxor.u32 %v522, 2147483648
        %v531 = vxor.u32 %v524, 2147483648
        %v532 = vxor.u32 %v527, 2147483648
        %v533 = vmul.f32 %v530, 1.442695
        %v534 = vpow.pop %v533
        %v535 = vmul.f32 %v531, 1.442695
        %v536 = vpow.pop %v535
        %v537 = vmul.f32 %v532, 1.442695
        %v538 = vpow.pop %v537
        %v539 = vadd.f32 %v534, 1.0
        %v540 = vadd.f32 %v536, 1.0
        %v541 = vadd.f32 %v538, 1.0
        %v542 = vrcp.pop %v539
        %v543 = vmul.f32 %v539, %v542
        %v544 = vsub.f32 1.0, %v543
        %v545 = vmul.f32 %v542, %v544
        %v546 = vadd.f32 %v542, %v545
        %vm547 = vweird.f32 %v539
        %vm548 = vweird.f32 %v542
        %vm549 = vmor %vm547, %vm548
        %v550 = vsel %vm549, %v542, %v546
        %v551 = vand.u32 2147483647, %v539
        %vm552 = vcmp.eq.f32.partialorder %v551, 8.507059e+37
        %v553 = vand.u32 %v539, 2147483648
        %v554 = vor.u32 1.1754944e-38, %v553
        %v555 = vsel %vm552, %v554, %v550
        %v556 = vmul.f32 1.0, %v555
        %v557 = vrcp.pop %v540
        %v558 = vmul.f32 %v540, %v557
        %v559 = vsub.f32 1.0, %v558
        %v560 = vmul.f32 %v557, %v559
        %v561 = vadd.f32 %v557, %v560
        %vm562 = vweird.f32 %v540
        %vm563 = vweird.f32 %v557
        %vm564 = vmor %vm562, %vm563
        %v565 = vsel %vm564, %v557, %v561
        %v566 = vand.u32 2147483647, %v540
        %vm567 = vcmp.eq.f32.partialorder %v566, 8.507059e+37
        %v568 = vand.u32 %v540, 2147483648
        %v569 = vor.u32 1.1754944e-38, %v568
        %v570 = vsel %vm567, %v569, %v565
        %v571 = vmul.f32 1.0, %v570
        %v572 = vrcp.pop %v541
        %v573 = vmul.f32 %v541, %v572
        %v574 = vsub.f32 1.0, %v573
        %v575 = vmul.f32 %v572, %v574
        %v576 = vadd.f32 %v572, %v575
        %vm577 = vweird.f32 %v541
        %vm578 = vweird.f32 %v572
        %vm579 = vmor %vm577, %vm578
        %v580 = vsel %vm579, %v572, %v576
        %v581 = vand.u32 2147483647, %v541
        %vm582 = vcmp.eq.f32.partialorder %v581, 8.507059e+37
        %v583 = vand.u32 %v541, 2147483648
        %v584 = vor.u32 1.1754944e-38, %v583
        %v585 = vsel %vm582, %v584, %v580
        %v586 = vmul.f32 1.0, %v585
        %v587 = vpack.c.bf16 %v556, %v556
        %v588 = vpack.c.bf16 %v571, %v571
        %v589 = vpack.c.bf16 %v586, %v586
        %590 = vst [vmem:[%s289] sm:$0xf] %v587
        %591 = vst [vmem:[%s289 + $0x4] sm:$0xf] %v588
        %592 = vst [vmem:[%s289 + $0x8] sm:$0xf] %v589
        %s593 = sand.u32 %s182, 1
        %s594 = scalar_lea.sflag [#allocation4], %s593
        %s595 = sand.u32 %s182, 1
        %s596 = smul.addr %s595, 12
        %s597 = scalar_lea.vmem [#allocation5], %s596
        // Predicated region
        $region53: #{tpu_custom_call.1} parent=47 // pred_check
          %p598 = pneg %p192
        $region54: #{tpu_custom_call.1} parent=47 // pred_check_branch
          %600 = sbr.rel (%p598) target = $region56
        $region55: #{tpu_custom_call.1} parent=47 // pred_region
          %s601 = smul.u32 3, %s22
          %603 = vsyncadd %s594, 0
          %s604 = smul.addr %s601, 4
          %s605 = scalar_lea.hbm %s7, %s604
          %s606 = sshll.u32 %s597, 4
          %s607 = int_to_ptr.vmem [resolvable:$true] %s606
          %s608 = sshll.u32 %s605, 4
          %s609 = int_to_ptr.hbm [resolvable:$true] %s608
          %614 = dma.vmem_to_hbm [thread:$0]  %s607, 192, %s609, %s594, 64, 64, 4
        $region56: #{tpu_custom_call.1} parent=47 // pred_fallthru
          _
      $region48: #{tpu_custom_call.1} parent=5 // pred_fallthru
        _
      %p615 = scmp.le.s32.totalorder 2, %s17
      // Predicated region
      $region57: #{tpu_custom_call.1} parent=5 // pred_check
        %p616 = pneg %p615
      $region58: #{tpu_custom_call.1} parent=5 // pred_check_branch
        %618 = sbr.rel (%p616) target = $region60
      $region59: #{tpu_custom_call.1} parent=5 // pred_region
        %s619 = ssub.s32 %s17, 2
        // Predicated region
        $region61: #{tpu_custom_call.1} parent=59 // pred_check
          %p620 = pneg %p198
        $region62: #{tpu_custom_call.1} parent=59 // pred_check_branch
          %622 = sbr.rel (%p620) target = $region64
        $region63: #{tpu_custom_call.1} parent=59 // pred_region
          %s623 = sand.u32 %s183, 1
          %s624 = scalar_lea.sflag [#allocation4], %s623
          %s625 = sand.u32 %s183, 1
          %s626 = smul.addr %s625, 12
          %s627 = scalar_lea.vmem [#allocation5], %s626
          %629 = dma.done %s624, 192
        $region64: #{tpu_custom_call.1} parent=59 // pred_fallthru
          _
      $region60: #{tpu_custom_call.1} parent=5 // pred_fallthru
        _
    $region6: #{tpu_custom_call.1} parent=1 // loop_footer
      %s21 = sadd.s32 1, %s17
    $region7: #{tpu_custom_call.1} parent=1 // loop_footer_branch
      %16 = sbr.rel target = $region3
    $region8: #{tpu_custom_call.1} parent=1 // loop_exit
      _
    %630 = vsyncpa [#allocation3], 1
    %s631 = scalar_lea.sflag [#allocation3], 1
    %632 = vsyncpa %s631, 1
    %633 = vsyncpa [#allocation4], 1
    %s634 = scalar_lea.sflag [#allocation4], 1
    %635 = vsyncpa %s634, 1

</llo_original>
